<compile_context>
chip_gen: v6e
topology: v6e:2x2x1
jax: 0.10.0
libtpu: 0.0.40
codegen_flags: <defaults>
</compile_context>

<pallas_src>
import functools

import jax
import jax.numpy as jnp
from jax.experimental import pallas as pl
from jax.experimental.pallas import tpu as pltpu


# ---------------------------------------------------------------------------
# Kernels
# ---------------------------------------------------------------------------
def _dyn_ln_kernel(sizes_ref, x_ref, w_ref, b_ref, o_ref, *, eps):
    """Masked layer-norm over the last axis with a per-batch dynamic size.

    sizes_ref : SMEM int32[B]            (scalar-prefetch)
    x_ref     : VMEM (1, TS, H) tile
    w_ref     : VMEM (1, H) f32 weight
    b_ref     : VMEM (1, H) f32 bias
    o_ref     : VMEM (1, TS, H) output tile
    """
    b = pl.program_id(0)
    size = sizes_ref[b]

    x = x_ref[0].astype(jnp.float32)                       # (TS, H)
    H = x.shape[1]

    # (1, H) lane mask -- single-row work, folded into weight/bias so no
    # (TS, H) select is needed on the store path.
    col = jax.lax.broadcasted_iota(jnp.int32, (1, H), 1)
    mask = col < size                                      # (1, H) bool
    mask_f = mask.astype(jnp.float32)                      # (1, H)
    w = jnp.where(mask, w_ref[...], 0.0)                   # (1, H)
    bias = jnp.where(mask, b_ref[...], 0.0)                # (1, H)

    # Clamp count so size == 0 cannot produce NaN (outputs are still exactly
    # zero there because diff, w and bias are all masked to zero).
    cnt = jnp.maximum(size, 1).astype(jnp.float32)
    inv_cnt = 1.0 / cnt                                    # scalar reciprocal

    xm = x * mask_f                                        # (TS, H)
    mean = jnp.sum(xm, axis=-1, keepdims=True) * inv_cnt   # (TS, 1)
    diff = (x - mean) * mask_f                             # (TS, H)
    var = jnp.sum(diff * diff, axis=-1, keepdims=True) * inv_cnt
    inv = jax.lax.rsqrt(var + eps)                         # (TS, 1)

    o_ref[0] = (diff * inv * w + bias).astype(o_ref.dtype)


def _plain_ln_kernel(x_ref, w_ref, b_ref, o_ref, *, eps):
    """Mask-free layer-norm (sample mode / full-width fast path)."""
    x = x_ref[0].astype(jnp.float32)                       # (TS, H)
    inv_cnt = 1.0 / x.shape[1]                             # static scalar
    mean = jnp.sum(x, axis=-1, keepdims=True) * inv_cnt    # (TS, 1)
    diff = x - mean
    var = jnp.sum(diff * diff, axis=-1, keepdims=True) * inv_cnt
    inv = jax.lax.rsqrt(var + eps)
    o_ref[0] = (diff * inv * w_ref[...] + b_ref[...]).astype(o_ref.dtype)


# ---------------------------------------------------------------------------
# Wrappers
# ---------------------------------------------------------------------------
_VMEM_LIMIT_BYTES = 32 * 1024 * 1024  # fits v5e/v6e/v7x scoped budgets


def _choose_ts(S, H, itemsize):
    """Sequence-tile rows: ~2 MiB per block, sublane-aligned, or full S."""
    target_bytes = 2 * 1024 * 1024
    rows = max(1, target_bytes // max(1, H * itemsize))
    align = 8 if itemsize >= 4 else 16      # bf16/fp8 pack along sublanes
    rows = max(align, (rows // align) * align)
    return S if rows >= S else rows


def _masked_layer_norm(x, sizes, weight, bias, eps):
    """x: (B, S, H); sizes: int32[B]; weight/bias: (H,) -- dynamic mode."""
    B, S, H = x.shape
    w2 = weight.astype(jnp.float32).reshape(1, H)
    b2 = bias.astype(jnp.float32).reshape(1, H)
    ts = _choose_ts(S, H, x.dtype.itemsize)
    grid = (B, pl.cdiv(S, ts))
    kernel = functools.partial(_dyn_ln_kernel, eps=eps)
    return pl.pallas_call(
        kernel,
        out_shape=jax.ShapeDtypeStruct((B, S, H), x.dtype),
        grid_spec=pltpu.PrefetchScalarGridSpec(
            num_scalar_prefetch=1,
            grid=grid,
            in_specs=[
                pl.BlockSpec((1, ts, H), lambda b, s, sizes: (b, s, 0)),
                pl.BlockSpec((1, H), lambda b, s, sizes: (0, 0)),
                pl.BlockSpec((1, H), lambda b, s, sizes: (0, 0)),
            ],
            out_specs=pl.BlockSpec((1, ts, H), lambda b, s, sizes: (b, s, 0)),
        ),
        compiler_params=pltpu.CompilerParams(
            dimension_semantics=("parallel", "parallel"),
            vmem_limit_bytes=_VMEM_LIMIT_BYTES,
        ),
    )(sizes, x, w2, b2)


def _plain_layer_norm(x, weight, bias, eps):
    """x: (B, S, H); weight/bias: (H,) -- sample-mode fast path (no mask)."""
    B, S, H = x.shape
    w2 = weight.astype(jnp.float32).reshape(1, H)
    b2 = bias.astype(jnp.float32).reshape(1, H)
    ts = _choose_ts(S, H, x.dtype.itemsize)
    grid = (B, pl.cdiv(S, ts))
    kernel = functools.partial(_plain_ln_kernel, eps=eps)
    return pl.pallas_call(
        kernel,
        out_shape=jax.ShapeDtypeStruct((B, S, H), x.dtype),
        grid_spec=pltpu.PrefetchScalarGridSpec(
            num_scalar_prefetch=0,
            grid=grid,
            in_specs=[
                pl.BlockSpec((1, ts, H), lambda b, s: (b, s, 0)),
                pl.BlockSpec((1, H), lambda b, s: (0, 0)),
                pl.BlockSpec((1, H), lambda b, s: (0, 0)),
            ],
            out_specs=pl.BlockSpec((1, ts, H), lambda b, s: (b, s, 0)),
        ),
        compiler_params=pltpu.CompilerParams(
            dimension_semantics=("parallel", "parallel"),
            vmem_limit_bytes=_VMEM_LIMIT_BYTES,
        ),
    )(x, w2, b2)


class DynamicLayerNorm:
    """JAX/Pallas port of the PyTorch DynamicLayerNorm module."""

    def __init__(self, max_size, eps=1e-5):
        self.max_size = (max_size,)
        self.weight = jnp.ones((max_size,), dtype=jnp.float32)
        self.bias = jnp.zeros((max_size,), dtype=jnp.float32)
        self.eps = eps

    def __call__(self, x, config):
        mode = 'sample' if isinstance(config, dict) else 'dynamic'
        if mode == 'sample':
            # x's last dim already equals `size` (F.layer_norm requirement);
            # every row uses the full width -> mask-free fast path.
            size = int(config['size'])
            return _plain_layer_norm(
                x, self.weight[:size], self.bias[:size], self.eps)
        else:
            # dynamic mode: per-batch-element size, tail positions zeroed.
            sizes = jnp.asarray(config).astype(jnp.int32)
            return _masked_layer_norm(
                x, sizes, self.weight, self.bias, self.eps)


# ---------------------------------------------------------------------------
# Reference + test
# ---------------------------------------------------------------------------
def _reference(x, sizes, weight, bias, eps):
    """Pure-JAX reference mirroring the PyTorch per-sample loop."""
    B, S, H = x.shape
    out = jnp.zeros_like(x)
    for i in range(B):
        sz = int(sizes[i])
        xi = x[i, :, :sz].astype(jnp.float32)
        mean = xi.mean(-1, keepdims=True)
        var = ((xi - mean) ** 2).mean(-1, keepdims=True)
        yi = (xi - mean) / jnp.sqrt(var + eps) * weight[:sz] + bias[:sz]
        out = out.at[i, :, :sz].set(yi.astype(x.dtype))
    return out


if __name__ == "__main__":
    key = jax.random.PRNGKey(0)
    B, S, H = 2, 8, 32
    x = jax.random.normal(key, (B, S, H), dtype=jnp.float32)

    ln = DynamicLayerNorm(max_size=H, eps=1e-5)
    kw, kb = jax.random.split(jax.random.PRNGKey(1))
    ln.weight = 1.0 + 0.1 * jax.random.normal(kw, (H,), dtype=jnp.float32)
    ln.bias = 0.1 * jax.random.normal(kb, (H,), dtype=jnp.float32)

    # --- dynamic mode: per-sample sizes (one full width, one truncated) ---
    config_dyn = jnp.array([H, 20], dtype=jnp.int32)
    out_dyn = jax.block_until_ready(ln(x, config_dyn))
    ref_dyn = _reference(x, [H, 20], ln.weight, ln.bias, ln.eps)
    assert jnp.allclose(out_dyn, ref_dyn, atol=1e-5, rtol=1e-5)

    # --- sample mode: static size dict, x already truncated to that size ---
    size = 24
    out_samp = jax.block_until_ready(ln(x[:, :, :size], {'size': size}))
    ref_samp = _reference(x[:, :, :size], [size, size],
                          ln.weight[:size], ln.bias[:size], ln.eps)
    assert jnp.allclose(out_samp, ref_samp, atol=1e-5, rtol=1e-5)

    print("KERNEL_OK")
</pallas_src>

<mosaic_0001>
module attributes {stable_mosaic.version = 11 : i64} {
  func.func @_dyn_ln_kernel(%arg0: i32, %arg1: i32, %arg2: memref<2xi32, #tpu.memory_space<smem>>, %arg3: memref<1x8x32xf32, #tpu.memory_space<vmem>>, %arg4: memref<1x32xf32, #tpu.memory_space<vmem>>, %arg5: memref<1x32xf32, #tpu.memory_space<vmem>>, %arg6: memref<1x8x32xf32, #tpu.memory_space<vmem>>) attributes {dimension_semantics = [#tpu.dimension_semantics<parallel>, #tpu.dimension_semantics<parallel>], iteration_bounds = array<i64: 2, 1>, scalar_prefetch = 1 : i64, scratch_operands = 0 : i64, tpu.core_type = #tpu.core_type<tc>, window_params = [{transform_indices = @transform_0, window_bounds = array<i64: 1, 8, 32>}, {pipeline_mode = #tpu.pipeline_mode<synchronous>, transform_indices = @transform_1, window_bounds = array<i64: 1, 32>}, {pipeline_mode = #tpu.pipeline_mode<synchronous>, transform_indices = @transform_2, window_bounds = array<i64: 1, 32>}, {transform_indices = @transform_3, window_bounds = array<i64: 1, 8, 32>}]} {
    %0 = arith.index_cast %arg0 : i32 to index
    %1 = memref.load %arg2[%0] : memref<2xi32, #tpu.memory_space<smem>>
    %c0 = arith.constant 0 : index
    %c0_0 = arith.constant 0 : index
    %c0_1 = arith.constant 0 : index
    %2 = vector.load %arg3[%c0, %c0_0, %c0_1] : memref<1x8x32xf32, #tpu.memory_space<vmem>>, vector<1x8x32xf32>
    %3 = vector.shape_cast %2 : vector<1x8x32xf32> to vector<8x32xf32>
    %4 = tpu.iota {dimensions = array<i32: 1>} : vector<1x32xi32>
    %5 = vector.broadcast %1 : i32 to vector<1x32xi32>
    %6 = arith.cmpi slt, %4, %5 : vector<1x32xi32>
    %7 = arith.extui %6 : vector<1x32xi1> to vector<1x32xi32>
    %8 = arith.sitofp %7 : vector<1x32xi32> to vector<1x32xf32>
    %c0_2 = arith.constant 0 : index
    %c0_3 = arith.constant 0 : index
    %9 = vector.load %arg4[%c0_2, %c0_3] : memref<1x32xf32, #tpu.memory_space<vmem>>, vector<1x32xf32>
    %cst = arith.constant 0.000000e+00 : f32
    %10 = vector.broadcast %cst : f32 to vector<1x32xf32>
    %11 = arith.select %6, %9, %10 : vector<1x32xi1>, vector<1x32xf32>
    %c0_4 = arith.constant 0 : index
    %c0_5 = arith.constant 0 : index
    %12 = vector.load %arg5[%c0_4, %c0_5] : memref<1x32xf32, #tpu.memory_space<vmem>>, vector<1x32xf32>
    %cst_6 = arith.constant 0.000000e+00 : f32
    %13 = vector.broadcast %cst_6 : f32 to vector<1x32xf32>
    %14 = arith.select %6, %12, %13 : vector<1x32xi1>, vector<1x32xf32>
    %c1_i32 = arith.constant 1 : i32
    %15 = arith.maxsi %1, %c1_i32 : i32
    %16 = arith.sitofp %15 : i32 to f32
    %cst_7 = arith.constant 1.000000e+00 : f32
    %17 = arith.divf %cst_7, %16 : f32
    %18 = vector.broadcast %8 : vector<1x32xf32> to vector<8x32xf32>
    %19 = arith.mulf %3, %18 : vector<8x32xf32>
    %cst_8 = arith.constant dense<0.000000e+00> : vector<8xf32>
    %20 = vector.multi_reduction <add>, %19, %cst_8 [1] : vector<8x32xf32> to vector<8xf32>
    %21 = vector.shape_cast %20 : vector<8xf32> to vector<8x1xf32>
    %22 = vector.broadcast %17 : f32 to vector<8x1xf32>
    %23 = arith.mulf %21, %22 : vector<8x1xf32>
    %24 = vector.broadcast %23 : vector<8x1xf32> to vector<8x32xf32>
    %25 = arith.subf %3, %24 : vector<8x32xf32>
    %26 = vector.broadcast %8 : vector<1x32xf32> to vector<8x32xf32>
    %27 = arith.mulf %25, %26 : vector<8x32xf32>
    %28 = arith.mulf %27, %27 : vector<8x32xf32>
    %cst_9 = arith.constant dense<0.000000e+00> : vector<8xf32>
    %29 = vector.multi_reduction <add>, %28, %cst_9 [1] : vector<8x32xf32> to vector<8xf32>
    %30 = vector.shape_cast %29 : vector<8xf32> to vector<8x1xf32>
    %31 = vector.broadcast %17 : f32 to vector<8x1xf32>
    %32 = arith.mulf %30, %31 : vector<8x1xf32>
    %cst_10 = arith.constant 9.99999974E-6 : f32
    %33 = vector.broadcast %cst_10 : f32 to vector<8x1xf32>
    %34 = arith.addf %32, %33 : vector<8x1xf32>
    %35 = math.rsqrt %34 : vector<8x1xf32>
    %36 = vector.broadcast %35 : vector<8x1xf32> to vector<8x32xf32>
    %37 = arith.mulf %27, %36 : vector<8x32xf32>
    %38 = vector.broadcast %11 : vector<1x32xf32> to vector<8x32xf32>
    %39 = arith.mulf %37, %38 : vector<8x32xf32>
    %40 = vector.broadcast %14 : vector<1x32xf32> to vector<8x32xf32>
    %41 = arith.addf %39, %40 : vector<8x32xf32>
    %c0_11 = arith.constant 0 : index
    %c0_12 = arith.constant 0 : index
    %c0_13 = arith.constant 0 : index
    %42 = vector.load %arg6[%c0_11, %c0_12, %c0_13] : memref<1x8x32xf32, #tpu.memory_space<vmem>>, vector<1x8x32xf32>
    %43 = vector.shape_cast %42 : vector<1x8x32xf32> to vector<8x32xf32>
    %44 = vector.shape_cast %41 : vector<8x32xf32> to vector<1x8x32xf32>
    tpu.vector_store %arg6[%c0_11, %c0_12, %c0_13], %44 {strides = array<i32>} : memref<1x8x32xf32, #tpu.memory_space<vmem>>, vector<1x8x32xf32>,
    return
  }
  func.func @transform_0(%arg0: i32, %arg1: i32, %arg2: memref<2xi32, #tpu.memory_space<smem>>) -> (i32, i32, i32) {
    %c0_i32 = arith.constant 0 : i32
    %c0_i32_0 = arith.constant 0 : i32
    return %arg0, %arg1, %c0_i32 : i32, i32, i32
  }
  func.func @transform_1(%arg0: i32, %arg1: i32, %arg2: memref<2xi32, #tpu.memory_space<smem>>) -> (i32, i32) {
    %c0_i32 = arith.constant 0 : i32
    %c0_i32_0 = arith.constant 0 : i32
    %c0_i32_1 = arith.constant 0 : i32
    return %c0_i32, %c0_i32_0 : i32, i32
  }
  func.func @transform_2(%arg0: i32, %arg1: i32, %arg2: memref<2xi32, #tpu.memory_space<smem>>) -> (i32, i32) {
    %c0_i32 = arith.constant 0 : i32
    %c0_i32_0 = arith.constant 0 : i32
    %c0_i32_1 = arith.constant 0 : i32
    return %c0_i32, %c0_i32_0 : i32, i32
  }
  func.func @transform_3(%arg0: i32, %arg1: i32, %arg2: memref<2xi32, #tpu.memory_space<smem>>) -> (i32, i32, i32) {
    %c0_i32 = arith.constant 0 : i32
    %c0_i32_0 = arith.constant 0 : i32
    return %arg0, %arg1, %c0_i32 : i32, i32, i32
  }
}

</mosaic_0001>

<llo_original>
// kernel: tpu_custom_call.1
$region0: #{tpu_custom_call.1}
  #allocation0 [shape = 'u32[]', space=smem, size = 0x4, offset = 0x4, fixed_abs, tag = 'smem constant byte address 0x4 - core index']
  #allocation1 [shape = 'u32[144,128]{1,0:T(1,128)}', space=vmem, size = 0x12000, scoped, tag = 'internal scratch']
  #allocation2 [shape = 's32[1]{0}', space=sflag, size = 0x4, scoped, tag = 'scoped memory for tpu_custom_call.1']
  #allocation3 [shape = 'u8[512]{0}', space=smem, size = 0x200, scoped, tag = 'prefetched SMEM operand 0']
  %s0 = inlined_call_operand.hbm [shape: s32[2], index: 0, kind: input, shape index: {}]
  %s1 = inlined_call_operand.hbm [shape: f32[2,8,32], index: 1, kind: input, shape index: {}]
  %s2 = inlined_call_operand.vmem [shape: f32[1,32], index: 2, kind: input, shape index: {}]
  %s3 = inlined_call_operand.vmem [shape: f32[1,32], index: 3, kind: input, shape index: {}]
  %s4 = inlined_call_operand.hbm [shape: f32[2,8,32], index: 4, kind: output, shape index: {}]
  %s5 = sld [smem:[#allocation0]]
  $region49: #{tpu_custom_call.1} parent=0
    _
  %s7 = ssub.s32 1, %s5
  %s8 = scalar_select 0, %s7, %s5
  %10 = dma.hbm_to_smem %s0, 16, [#allocation3], [#allocation2]
  %11 = dma.done [#allocation2], 16
  %12 = sfence
  $region1: #{tpu_custom_call.1} parent=0
    #allocation4 [shape = 'u8[8192]{0}', space=vmem, size = 0x2000, scoped, tag = 'input window, operand 1']
    #allocation5 [shape = 's32[2]{0}', space=sflag, size = 0x8, scoped, tag = 'scoped memory for tpu_custom_call.1']
    #allocation6 [shape = 's32[2]{0}', space=sflag, size = 0x8, scoped, tag = 'scoped memory for tpu_custom_call.1']
    #allocation7 [shape = 'u8[8192]{0}', space=vmem, size = 0x2000, scoped, tag = 'output window, operand 0']
    %13 = vsyncpa [#allocation5], 0
    %s14 = scalar_lea.sflag [#allocation5], 1
    %15 = vsyncpa %s14, 0
    %16 = vsyncpa [#allocation6], 0
    %s17 = scalar_lea.sflag [#allocation6], 1
    %18 = vsyncpa %s17, 0
    loop: start=0, step=1, limit=4
    $region2: #{tpu_custom_call.1} parent=1 // loop_pre_header
      _
    $region3: #{tpu_custom_call.1} parent=1 // loop_header
      %s20 = sphi 0, %s24
      %p21 = scmp.ge.s32.totalorder %s20, 4
      %s27 = sphi 0, %s39
      %s28 = sphi 0, %s35
      %s29 = sphi 0, %s27
      %s30 = sphi 0, %s28
      %s31 = sphi 0, %s29
      %s32 = sphi 0, %s30
      %s44 = sphi 0, %s46
      %s47 = sphi 0, %s44
      %s48 = sphi 0, %s47
      %s64 = sphi 0, %s48
      %s68 = sphi 0, %s68
      %s70 = sphi 0, %s68
      %s71 = sphi 0, %s70
      %s85 = sphi 0, %s71
      %s89 = sphi 0, %s89
      %s91 = sphi 0, %s89
      %s92 = sphi 0, %s91
      %s106 = sphi 0, %s92
      %s114 = sphi 0, %s116
      %s117 = sphi 0, %s114
      %s118 = sphi 0, %s117
      %s134 = sphi 0, %s118
    $region4: #{tpu_custom_call.1} parent=1 // loop_header_branch
      %23 = sbr.rel (%p21) target = $region8
    $region5: #{tpu_custom_call.1} parent=1 // loop_body
      %s25 = ssub.s32 %s20, 1
      %s26 = ssub.s32 %s20, 2
      %s33 = sadd.s32 1, %s28
      %p34 = scmp.ge.s32.totalorder %s33, 1
      %s35 = scalar_select %p34, 0, %s33
      %s36 = sadd.s32 1, %s27
      %s37 = scalar_select %p34, %s36, %s27
      %p38 = scmp.ge.s32.totalorder %s37, 2
      %s39 = scalar_select %p38, 0, %s37
      %s40 = ssub.s32 %s27, %s39
      %s41 = ssub.s32 %s28, %s35
      %s42 = sor.u32 %s40, %s41
      %p43 = scmp.eq.s32.totalorder %s42, 0
      %s45 = sadd.s32 %s44, 1
      %s46 = scalar_select %p43, %s44, %s45
      %p49 = pneg %p43
      %p50 = scmp.eq.s32.totalorder %s20, 1
      %p51 = por %p49, %p50
      %p52 = scmp.ne.s32.totalorder %s44, %s47
      %p53 = scmp.eq.s32.totalorder %s20, 0
      %p54 = por %p52, %p53
      %p55 = scmp.ne.s32.totalorder %s44, %s47
      %p56 = scmp.eq.s32.totalorder %s25, 1
      %p57 = por %p55, %p56
      %p58 = scmp.ne.s32.totalorder %s47, %s48
      %p59 = scmp.eq.s32.totalorder %s25, 0
      %p60 = por %p58, %p59
      %p61 = scmp.ne.s32.totalorder %s47, %s48
      %p62 = scmp.eq.s32.totalorder %s26, 1
      %p63 = por %p61, %p62
      %p65 = scmp.ne.s32.totalorder %s48, %s64
      %p66 = scmp.eq.s32.totalorder %s26, 0
      %p67 = por %p65, %p66
      %s69 = sadd.s32 %s68, 1
      %p72 = scmp.eq.s32.totalorder %s20, 1
      %p73 = scmp.ne.s32.totalorder %s68, %s70
      %p74 = scmp.eq.s32.totalorder %s20, 0
      %p75 = por %p73, %p74
      %p76 = scmp.ne.s32.totalorder %s68, %s70
      %p77 = scmp.eq.s32.totalorder %s25, 1
      %p78 = por %p76, %p77
      %p79 = scmp.ne.s32.totalorder %s70, %s71
      %p80 = scmp.eq.s32.totalorder %s25, 0
      %p81 = por %p79, %p80
      %p82 = scmp.ne.s32.totalorder %s70, %s71
      %p83 = scmp.eq.s32.totalorder %s26, 1
      %p84 = por %p82, %p83
      %p86 = scmp.ne.s32.totalorder %s71, %s85
      %p87 = scmp.eq.s32.totalorder %s26, 0
      %p88 = por %p86, %p87
      %s90 = sadd.s32 %s89, 1
      %p93 = scmp.eq.s32.totalorder %s20, 1
      %p94 = scmp.ne.s32.totalorder %s89, %s91
      %p95 = scmp.eq.s32.totalorder %s20, 0
      %p96 = por %p94, %p95
      %p97 = scmp.ne.s32.totalorder %s89, %s91
      %p98 = scmp.eq.s32.totalorder %s25, 1
      %p99 = por %p97, %p98
      %p100 = scmp.ne.s32.totalorder %s91, %s92
      %p101 = scmp.eq.s32.totalorder %s25, 0
      %p102 = por %p100, %p101
      %p103 = scmp.ne.s32.totalorder %s91, %s92
      %p104 = scmp.eq.s32.totalorder %s26, 1
      %p105 = por %p103, %p104
      %p107 = scmp.ne.s32.totalorder %s92, %s106
      %p108 = scmp.eq.s32.totalorder %s26, 0
      %p109 = por %p107, %p108
      %s110 = ssub.s32 %s27, %s39
      %s111 = ssub.s32 %s28, %s35
      %s112 = sor.u32 %s110, %s111
      %p113 = scmp.eq.s32.totalorder %s112, 0
      %s115 = sadd.s32 %s114, 1
      %s116 = scalar_select %p113, %s114, %s115
      %p119 = pneg %p113
      %p120 = scmp.eq.s32.totalorder %s20, 1
      %p121 = por %p119, %p120
      %p122 = scmp.ne.s32.totalorder %s114, %s117
      %p123 = scmp.eq.s32.totalorder %s20, 0
      %p124 = por %p122, %p123
      %p125 = scmp.ne.s32.totalorder %s114, %s117
      %p126 = scmp.eq.s32.totalorder %s25, 1
      %p127 = por %p125, %p126
      %p128 = scmp.ne.s32.totalorder %s117, %s118
      %p129 = scmp.eq.s32.totalorder %s25, 0
      %p130 = por %p128, %p129
      %p131 = scmp.ne.s32.totalorder %s117, %s118
      %p132 = scmp.eq.s32.totalorder %s26, 1
      %p133 = por %p131, %p132
      %p135 = scmp.ne.s32.totalorder %s118, %s134
      %p136 = scmp.eq.s32.totalorder %s26, 0
      %p137 = por %p135, %p136
      %p138 = scmp.le.s32.totalorder 1, %s20
      %p139 = scmp.lt.s32.totalorder %s20, 3
      %p140 = pnand %p138, %p139
      %p141 = pneg %p140
      // Predicated region
      $region9: #{tpu_custom_call.1} parent=5 // pred_check
        _
      $region10: #{tpu_custom_call.1} parent=5 // pred_check_branch
        %143 = sbr.rel (%p140) target = $region12
      $region11: #{tpu_custom_call.1} parent=5 // pred_region
        %s144 = ssub.s32 %s20, 1
        // Predicated region
        $region13: #{tpu_custom_call.1} parent=11 // pred_check
          %p145 = pneg %p81
        $region14: #{tpu_custom_call.1} parent=11 // pred_check_branch
          %147 = sbr.rel (%p145) target = $region16
        $region15: #{tpu_custom_call.1} parent=11 // pred_region
          _
        $region16: #{tpu_custom_call.1} parent=11 // pred_fallthru
          _
        // Predicated region
        $region17: #{tpu_custom_call.1} parent=11 // pred_check
          %p148 = pneg %p102
        $region18: #{tpu_custom_call.1} parent=11 // pred_check_branch
          %150 = sbr.rel (%p148) target = $region20
        $region19: #{tpu_custom_call.1} parent=11 // pred_region
          _
        $region20: #{tpu_custom_call.1} parent=11 // pred_fallthru
          _
      $region12: #{tpu_custom_call.1} parent=5 // pred_fallthru
        _
      %p151 = scmp.lt.s32.totalorder %s20, 2
      // Predicated region
      $region21: #{tpu_custom_call.1} parent=5 // pred_check
        %p152 = pneg %p151
      $region22: #{tpu_custom_call.1} parent=5 // pred_check_branch
        %154 = sbr.rel (%p152) target = $region24
      $region23: #{tpu_custom_call.1} parent=5 // pred_region
        // Predicated region
        $region25: #{tpu_custom_call.1} parent=23 // pred_check
          %p155 = pneg %p54
        $region26: #{tpu_custom_call.1} parent=23 // pred_check_branch
          %157 = sbr.rel (%p155) target = $region28
        $region27: #{tpu_custom_call.1} parent=23 // pred_region
          %s158 = sand.u32 %s44, 1
          %s159 = scalar_lea.sflag [#allocation5], %s158
          %s160 = sand.u32 %s44, 1
          %s161 = smul.addr %s160, 8
          %s162 = scalar_lea.vmem [#allocation4], %s161
          %s164 = ssub.s32 128, 128
          %165 = vsyncadd %s159, %s164
          %s166 = sadd.s32 %s28, %s27
          %s167 = smul.addr %s166, 128
          %s168 = scalar_lea.hbm %s1, %s167
          %s170 = sshll.u32 %s162, 4
          %s171 = int_to_ptr.vmem [resolvable:$true] %s170
          %173 = dma.hbm_to_vmem [thread:$0]  %s168, 128, %s171, %s159
        $region28: #{tpu_custom_call.1} parent=23 // pred_fallthru
          _
      $region24: #{tpu_custom_call.1} parent=5 // pred_fallthru
        _
      %p174 = scmp.le.s32.totalorder 1, %s20
      %p175 = scmp.lt.s32.totalorder %s20, 3
      %p176 = pnand %p174, %p175
      %p177 = pneg %p176
      // Predicated region
      $region29: #{tpu_custom_call.1} parent=5 // pred_check
        _
      $region30: #{tpu_custom_call.1} parent=5 // pred_check_branch
        %179 = sbr.rel (%p176) target = $region32
      $region31: #{tpu_custom_call.1} parent=5 // pred_region
        %s180 = ssub.s32 %s20, 1
        %s181 = sand.u32 %s47, 1
        %s182 = scalar_lea.sflag [#allocation5], %s181
        %s183 = sand.u32 %s47, 1
        %s184 = smul.addr %s183, 8
        %s185 = scalar_lea.vmem [#allocation4], %s184
        // Predicated region
        $region33: #{tpu_custom_call.1} parent=31 // pred_check
          %p186 = pneg %p60
        $region34: #{tpu_custom_call.1} parent=31 // pred_check_branch
          %188 = sbr.rel (%p186) target = $region36
        $region35: #{tpu_custom_call.1} parent=31 // pred_region
          %189 = dma.done %s182, 128
        $region36: #{tpu_custom_call.1} parent=31 // pred_fallthru
          _
        %s190 = sand.u32 %s47, 1
        %s191 = scalar_lea.sflag [#allocation5], %s190
        %s192 = sand.u32 %s47, 1
        %s193 = smul.addr %s192, 8
        %s194 = scalar_lea.vmem [#allocation4], %s193
        %p195 = pneg %p60
        %p196 = pneg %p57
        %p197 = pneg %p81
        %p198 = pneg %p78
        %p199 = pneg %p102
        %p200 = pneg %p99
        %p201 = pneg %p130
        %p202 = pneg %p127
        %s203 = sand.u32 %s117, 1
        %s204 = scalar_lea.sflag [#allocation6], %s203
        %s205 = sand.u32 %s117, 1
        %s206 = smul.addr %s205, 8
        %s207 = scalar_lea.vmem [#allocation7], %s206
        %s208 = sld [smem:[#allocation3 + %s29]]
        %v209 = vld [vmem:[%s185] sm:$0xff]
        %v210 = vlaneseq
        %v211 = vand.u32 %v210, 127
        %v212 = vstv %s208
        %vm213 = vcmp.lt.s32.totalorder %v211, %v212
        %v214 = vsel %vm213, 1, 0
        %v215 = vcvt.s32.f32 %v214
        %v216 = vld [vmem:[%s2] sm:$0x1]
        %v217 = vsel %vm213, %v216, 0.0
        %v218 = vld [vmem:[%s3] sm:$0x1]
        %v219 = vsel %vm213, %v218, 0.0
        %p220 = scmp.gt.s32.totalorder %s208, 1
        %s221 = scalar_select %p220, %s208, 1
        %s222 = scvt.s32.f32 %s221
        %v223 = vstv %s222
        %v224 = vrcp.pop %v223
        %s225 = vtos %v224
        %v226 = vmul.f32 %v209, %v215
        %vm227 = vcmask 261120
        %v228 = vsel %vm227, %v226, 0.0
        %229 = vadd.xlane.f32.xlu0 %v228
        %v230 = vpop.xlane.xlu0 %229
        %v231 = vstv %s225
        %v232 = vmul.f32 %v230, %v231
        %v233 = vsub.f32 %v209, %v232
        %v234 = vmul.f32 %v233, %v215
        %v235 = vmul.f32 %v234, %v234
        %v236 = vsel %vm227, %v235, 0.0
        %237 = vadd.xlane.f32.xlu0 %v236
        %v238 = vpop.xlane.xlu0 %237
        %v239 = vmul.f32 %v238, %v231
        %v240 = vadd.f32 %v239, 1e-05
        %v241 = vrsqrt.pop %v240
        %v242 = vmul.f32 %v234, %v241
        %v243 = vlaneseq
        %v244 = vshrl.u32 %v243, 7
        %v245 = vsub.s32 0, %v244
        %v246 = vrot.slane %v217, %v245
        %v247 = vmul.f32 %v242, %v246
        %v248 = vlaneseq
        %v249 = vshrl.u32 %v248, 7
        %v250 = vsub.s32 0, %v249
        %v251 = vrot.slane %v219, %v250
        %v252 = vadd.f32 %v247, %v251
        %253 = vst.msk [vmem:[%s207] sm:$0xff] %vm227, %v252
        %s254 = sand.u32 %s117, 1
        %s255 = scalar_lea.sflag [#allocation6], %s254
        %s256 = sand.u32 %s117, 1
        %s257 = smul.addr %s256, 8
        %s258 = scalar_lea.vmem [#allocation7], %s257
        // Predicated region
        $region37: #{tpu_custom_call.1} parent=31 // pred_check
          %p259 = pneg %p127
        $region38: #{tpu_custom_call.1} parent=31 // pred_check_branch
          %261 = sbr.rel (%p259) target = $region40
        $region39: #{tpu_custom_call.1} parent=31 // pred_region
          %s263 = ssub.s32 128, 128
          %264 = vsyncadd %s255, %s263
          %s265 = sadd.s32 %s30, %s29
          %s266 = smul.addr %s265, 128
          %s267 = scalar_lea.hbm %s4, %s266
          %s269 = sshll.u32 %s258, 4
          %s270 = int_to_ptr.vmem [resolvable:$true] %s269
          %272 = dma.vmem_to_hbm [thread:$0]  %s270, 128, %s267, %s255
        $region40: #{tpu_custom_call.1} parent=31 // pred_fallthru
          _
      $region32: #{tpu_custom_call.1} parent=5 // pred_fallthru
        _
      %p273 = scmp.le.s32.totalorder 2, %s20
      // Predicated region
      $region41: #{tpu_custom_call.1} parent=5 // pred_check
        %p274 = pneg %p273
      $region42: #{tpu_custom_call.1} parent=5 // pred_check_branch
        %276 = sbr.rel (%p274) target = $region44
      $region43: #{tpu_custom_call.1} parent=5 // pred_region
        %s277 = ssub.s32 %s20, 2
        // Predicated region
        $region45: #{tpu_custom_call.1} parent=43 // pred_check
          %p278 = pneg %p133
        $region46: #{tpu_custom_call.1} parent=43 // pred_check_branch
          %280 = sbr.rel (%p278) target = $region48
        $region47: #{tpu_custom_call.1} parent=43 // pred_region
          %s281 = sand.u32 %s118, 1
          %s282 = scalar_lea.sflag [#allocation6], %s281
          %s283 = sand.u32 %s118, 1
          %s284 = smul.addr %s283, 8
          %s285 = scalar_lea.vmem [#allocation7], %s284
          %286 = dma.done %s282, 128
        $region48: #{tpu_custom_call.1} parent=43 // pred_fallthru
          _
      $region44: #{tpu_custom_call.1} parent=5 // pred_fallthru
        _
    $region6: #{tpu_custom_call.1} parent=1 // loop_footer
      %s24 = sadd.s32 1, %s20
    $region7: #{tpu_custom_call.1} parent=1 // loop_footer_branch
      %19 = sbr.rel target = $region3
    $region8: #{tpu_custom_call.1} parent=1 // loop_exit
      _
    %287 = vsyncpa [#allocation5], 1
    %s288 = scalar_lea.sflag [#allocation5], 1
    %289 = vsyncpa %s288, 1
    %290 = vsyncpa [#allocation6], 1
    %s291 = scalar_lea.sflag [#allocation6], 1
    %292 = vsyncpa %s291, 1

</llo_original>
